<compile_context>
chip_gen: v7x
topology: tpu7x:2x2x1
jax: 0.10.0
libtpu: 0.0.40
codegen_flags: <defaults>
</compile_context>

<pallas_src>
import jax
import jax.numpy as jnp
from jax import lax
from jax.experimental import pallas as pl
from jax.experimental.pallas import tpu as pltpu


def _pnet_kernel_single_k(x_ref, w_ref, b_ref, o_ref):
    # x_ref: [TILE_B, org_dim], w_ref: [k_pad, org_dim] (PyTorch layout),
    # b_ref: [1, k_pad], o_ref: [TILE_B, k_pad].
    acc = lax.dot_general(
        x_ref[...],
        w_ref[...],
        dimension_numbers=(((1,), (1,)), ((), ())),   # contract x dim1 with w dim1
        preferred_element_type=jnp.float32,           # MXU, f32 accumulate
    )
    acc = acc + b_ref[...]                            # VPU bias broadcast (free filler)
    o_ref[...] = jnp.tanh(acc).astype(o_ref.dtype)    # tanh on EUP, cast on store


def _pnet_kernel_k_tiled(x_ref, w_ref, b_ref, o_ref, acc_ref):
    # Grid = (B tiles, K tiles); K axis is last + "arbitrary"; acc lives in VMEM.
    k = pl.program_id(1)

    @pl.when(k == 0)
    def _():
        acc_ref[...] = jnp.zeros_like(acc_ref)

    acc_ref[...] += lax.dot_general(
        x_ref[...],
        w_ref[...],
        dimension_numbers=(((1,), (1,)), ((), ())),
        preferred_element_type=jnp.float32,
    )

    @pl.when(k == pl.num_programs(1) - 1)
    def _():
        o_ref[...] = jnp.tanh(acc_ref[...] + b_ref[...]).astype(o_ref.dtype)


def pnet_encoder(x, weight, bias, *, tile_b=512, tile_k=None, use_bf16_mxu=False,
                 vmem_limit_bytes=64 * 1024 * 1024):
    """y = tanh(x @ weight.T + bias).

    x: [B, org_dim], weight: [k_bits, org_dim] (PyTorch nn.Linear layout),
    bias: [k_bits].
    """
    B, org_dim = x.shape
    k_bits = weight.shape[0]
    out_dtype = x.dtype

    # Lane-dense output: pad k_bits up to a multiple of 128 with zero weight
    # rows / bias entries (the tanh(0) columns are sliced off afterwards).
    k_pad = ((k_bits + 127) // 128) * 128
    if k_pad != k_bits:
        weight = jnp.pad(weight, ((0, k_pad - k_bits), (0, 0)))
        bias = jnp.pad(bias, (0, k_pad - k_bits))
    b2 = bias.reshape(1, k_pad).astype(jnp.float32)

    # Batch tile: multiple of 8 sublanes, or the full batch when it fits.
    if B <= tile_b:
        tile_b = B
    else:
        tile_b = max(8, (tile_b // 8) * 8)
    n_b = pl.cdiv(B, tile_b)

    # Decide on K tiling: only worth it when the resident weight/activation
    # blocks would otherwise dominate VMEM (large org_dim).
    if tile_k is None and org_dim > 2048:
        tile_k = 512
    use_k_tiling = tile_k is not None and org_dim > tile_k

    if use_bf16_mxu:
        x_in = x.astype(jnp.bfloat16)
        w_in = weight.astype(jnp.bfloat16)
    else:
        x_in = x
        w_in = weight

    cparams_single = pltpu.CompilerParams(
        dimension_semantics=("parallel",),
        vmem_limit_bytes=vmem_limit_bytes,
    )

    if not use_k_tiling:
        out = pl.pallas_call(
            _pnet_kernel_single_k,
            out_shape=jax.ShapeDtypeStruct((B, k_pad), out_dtype),
            grid_spec=pltpu.PrefetchScalarGridSpec(
                num_scalar_prefetch=0,
                grid=(n_b,),
                in_specs=[
                    pl.BlockSpec((tile_b, org_dim), lambda i: (i, 0)),  # x tile
                    pl.BlockSpec((k_pad, org_dim), lambda i: (0, 0)),   # weight resident
                    pl.BlockSpec((1, k_pad), lambda i: (0, 0)),         # bias resident
                ],
                out_specs=pl.BlockSpec((tile_b, k_pad), lambda i: (i, 0)),
            ),
            compiler_params=cparams_single,
        )(x_in, w_in, b2)
    else:
        # Pad the contraction dim to a multiple of tile_k (and of 128 lanes);
        # zero padding contributes nothing to the accumulation.
        tile_k = max(128, (tile_k // 128) * 128)
        k_dim_pad = ((org_dim + tile_k - 1) // tile_k) * tile_k
        if k_dim_pad != org_dim:
            x_in = jnp.pad(x_in, ((0, 0), (0, k_dim_pad - org_dim)))
            w_in = jnp.pad(w_in, ((0, 0), (0, k_dim_pad - org_dim)))
        n_k = k_dim_pad // tile_k

        out = pl.pallas_call(
            _pnet_kernel_k_tiled,
            out_shape=jax.ShapeDtypeStruct((B, k_pad), out_dtype),
            grid_spec=pltpu.PrefetchScalarGridSpec(
                num_scalar_prefetch=0,
                grid=(n_b, n_k),                       # reduction axis last
                in_specs=[
                    pl.BlockSpec((tile_b, tile_k), lambda i, k: (i, k)),  # x tile
                    pl.BlockSpec((k_pad, tile_k), lambda i, k: (0, k)),   # weight K-slab
                    pl.BlockSpec((1, k_pad), lambda i, k: (0, 0)),        # bias resident
                ],
                out_specs=pl.BlockSpec((tile_b, k_pad), lambda i, k: (i, 0)),
                scratch_shapes=[pltpu.VMEM((tile_b, k_pad), jnp.float32)],
            ),
            compiler_params=pltpu.CompilerParams(
                dimension_semantics=("parallel", "arbitrary"),
                vmem_limit_bytes=vmem_limit_bytes,
            ),
        )(x_in, w_in, b2)

    return out[:, :k_bits] if k_pad != k_bits else out


if __name__ == "__main__":
    key = jax.random.PRNGKey(0)

    # ---- Test 1: small shapes consistent with the module's forward (single-K path,
    # batch grid of 2 steps). --------------------------------------------------
    B, org_dim, k_bits = 16, 32, 16
    kx, kw, kb = jax.random.split(key, 3)
    bound = 1.0 / (org_dim ** 0.5)
    weight = jax.random.uniform(kw, (k_bits, org_dim), jnp.float32, -bound, bound)
    bias = jax.random.uniform(kb, (k_bits,), jnp.float32, -bound, bound)
    x = jax.random.normal(kx, (B, org_dim), jnp.float32)

    y = pnet_encoder(x, weight, bias, tile_b=8)
    jax.block_until_ready(y)
    y_ref = jnp.tanh(x @ weight.T + bias)
    assert y.shape == (B, k_bits)
    assert jnp.allclose(y, y_ref, atol=1e-5, rtol=1e-5)

    # bf16-MXU variant (looser tolerance; accumulate/bias/tanh stay f32).
    y_bf16 = pnet_encoder(x, weight, bias, tile_b=8, use_bf16_mxu=True)
    jax.block_until_ready(y_bf16)
    assert jnp.allclose(y_bf16, y_ref, atol=2e-2, rtol=2e-2)

    # ---- Test 2: exercise the K-tiled accumulator path (small but multi-step K). --
    B2, org_dim2, k_bits2 = 16, 384, 16
    k2 = jax.random.PRNGKey(1)
    kx2, kw2, kb2 = jax.random.split(k2, 3)
    bound2 = 1.0 / (org_dim2 ** 0.5)
    weight2 = jax.random.uniform(kw2, (k_bits2, org_dim2), jnp.float32, -bound2, bound2)
    bias2 = jax.random.uniform(kb2, (k_bits2,), jnp.float32, -bound2, bound2)
    x2 = jax.random.normal(kx2, (B2, org_dim2), jnp.float32)

    y2 = pnet_encoder(x2, weight2, bias2, tile_b=8, tile_k=128)   # 3 K steps
    jax.block_until_ready(y2)
    y2_ref = jnp.tanh(x2 @ weight2.T + bias2)
    assert y2.shape == (B2, k_bits2)
    assert jnp.allclose(y2, y2_ref, atol=1e-5, rtol=1e-5)

    print("KERNEL_OK")
</pallas_src>

<mosaic_0001>
module attributes {stable_mosaic.version = 11 : i64} {
  func.func @_pnet_kernel_single_k(%arg0: i32, %arg1: memref<8x32xf32, #tpu.memory_space<vmem>>, %arg2: memref<128x32xf32, #tpu.memory_space<vmem>>, %arg3: memref<1x128xf32, #tpu.memory_space<vmem>>, %arg4: memref<8x128xf32, #tpu.memory_space<vmem>>) attributes {dimension_semantics = [#tpu.dimension_semantics<parallel>], iteration_bounds = array<i64: 2>, scalar_prefetch = 0 : i64, scratch_operands = 0 : i64, tpu.core_type = #tpu.core_type<tc>, window_params = [{transform_indices = @transform_0, window_bounds = array<i64: 8, 32>}, {pipeline_mode = #tpu.pipeline_mode<synchronous>, transform_indices = @transform_1, window_bounds = array<i64: 128, 32>}, {pipeline_mode = #tpu.pipeline_mode<synchronous>, transform_indices = @transform_2, window_bounds = array<i64: 1, 128>}, {transform_indices = @transform_3, window_bounds = array<i64: 8, 128>}]} {
    %c0 = arith.constant 0 : index
    %c0_0 = arith.constant 0 : index
    %0 = vector.load %arg1[%c0, %c0_0] : memref<8x32xf32, #tpu.memory_space<vmem>>, vector<8x32xf32>
    %c0_1 = arith.constant 0 : index
    %c0_2 = arith.constant 0 : index
    %1 = vector.load %arg2[%c0_1, %c0_2] : memref<128x32xf32, #tpu.memory_space<vmem>>, vector<128x32xf32>
    %cst = arith.constant dense<0.000000e+00> : vector<8x128xf32>
    %2 = tpu.matmul %0, %1, %cst {dimension_numbers = #tpu.dot_dimension_numbers<[1], [1], [0], [0], [0, 0, 1, 0], [], []>} : vector<8x32xf32>, vector<128x32xf32>, vector<8x128xf32> -> vector<8x128xf32>
    %c0_3 = arith.constant 0 : index
    %c0_4 = arith.constant 0 : index
    %3 = vector.load %arg3[%c0_3, %c0_4] : memref<1x128xf32, #tpu.memory_space<vmem>>, vector<1x128xf32>
    %4 = vector.broadcast %3 : vector<1x128xf32> to vector<8x128xf32>
    %5 = arith.addf %2, %4 : vector<8x128xf32>
    %6 = math.tanh %5 : vector<8x128xf32>
    %c0_5 = arith.constant 0 : index
    %c0_6 = arith.constant 0 : index
    %7 = vector.load %arg4[%c0_5, %c0_6] : memref<8x128xf32, #tpu.memory_space<vmem>>, vector<8x128xf32>
    tpu.vector_store %arg4[%c0_5, %c0_6], %6 {strides = array<i32>} : memref<8x128xf32, #tpu.memory_space<vmem>>, vector<8x128xf32>,
    return
  }
  func.func @transform_0(%arg0: i32) -> (i32, i32) {
    %c0_i32 = arith.constant 0 : i32
    %c0_i32_0 = arith.constant 0 : i32
    return %arg0, %c0_i32 : i32, i32
  }
  func.func @transform_1(%arg0: i32) -> (i32, i32) {
    %c0_i32 = arith.constant 0 : i32
    %c0_i32_0 = arith.constant 0 : i32
    %c0_i32_1 = arith.constant 0 : i32
    return %c0_i32, %c0_i32_0 : i32, i32
  }
  func.func @transform_2(%arg0: i32) -> (i32, i32) {
    %c0_i32 = arith.constant 0 : i32
    %c0_i32_0 = arith.constant 0 : i32
    %c0_i32_1 = arith.constant 0 : i32
    return %c0_i32, %c0_i32_0 : i32, i32
  }
  func.func @transform_3(%arg0: i32) -> (i32, i32) {
    %c0_i32 = arith.constant 0 : i32
    %c0_i32_0 = arith.constant 0 : i32
    return %arg0, %c0_i32 : i32, i32
  }
}

</mosaic_0001>

<llo_original>
// kernel: tpu_custom_call.1
$region0: #{tpu_custom_call.1}
  #allocation0 [shape = 'u32[]', space=smem, size = 0x4, offset = 0x4, fixed_abs, tag = 'smem constant byte address 0x4 - core index']
  #allocation1 [shape = 'u32[144,128]{1,0:T(1,128)}', space=vmem, size = 0x12000, scoped, tag = 'internal scratch']
  %s0 = inlined_call_operand.hbm [shape: f32[16,32], index: 0, kind: input, shape index: {}]
  %s1 = inlined_call_operand.hbm [shape: f32[128,32], index: 1, kind: input, shape index: {}]
  %s2 = inlined_call_operand.hbm [shape: f32[1,128], index: 2, kind: input, shape index: {}]
  %s3 = inlined_call_operand.hbm [shape: f32[16,128], index: 3, kind: output, shape index: {}]
  %s4 = sld [smem:[#allocation0]]
  $region57: #{tpu_custom_call.1} parent=0
    _
  %s6 = ssub.s32 1, %s4
  %s7 = scalar_select 0, %s6, %s4
  $region1: #{tpu_custom_call.1} parent=0
    #allocation2 [shape = 'u8[8192]{0}', space=vmem, size = 0x2000, scoped, tag = 'input window, operand 0']
    #allocation3 [shape = 's32[2]{0}', space=sflag, size = 0x8, scoped, tag = 'scoped memory for tpu_custom_call.1']
    #allocation4 [shape = 's32[2]{0}', space=sflag, size = 0x8, scoped, tag = 'scoped memory for tpu_custom_call.1']
    #allocation5 [shape = 'u8[65536]{0}', space=vmem, size = 0x10000, scoped, tag = 'input window, operand 1, single buffered']
    #allocation6 [shape = 's32[1]{0}', space=sflag, size = 0x4, scoped, tag = 'scoped memory for tpu_custom_call.1']
    #allocation7 [shape = 'u8[512]{0}', space=vmem, size = 0x400, scoped, tag = 'input window, operand 2, single buffered']
    #allocation8 [shape = 'u8[8192]{0}', space=vmem, size = 0x2000, scoped, tag = 'output window, operand 0']
    %8 = vsyncpa [#allocation3], 0
    %s9 = scalar_lea.sflag [#allocation3], 1
    %10 = vsyncpa %s9, 0
    %11 = vsyncpa [#allocation6], 0
    %12 = vsyncpa [#allocation4], 0
    %s13 = scalar_lea.sflag [#allocation4], 1
    %14 = vsyncpa %s13, 0
    loop: start=0, step=1, limit=4
    $region2: #{tpu_custom_call.1} parent=1 // loop_pre_header
      _
    $region3: #{tpu_custom_call.1} parent=1 // loop_header
      %s16 = sphi 0, %s20
      %p17 = scmp.ge.s32.totalorder %s16, 4
      %s26 = sphi 0, %s28
      %s29 = sphi 0, %s26
      %s30 = sphi 0, %s29
      %s46 = sphi 0, %s30
      %s50 = sphi 0, %s50
      %s52 = sphi 0, %s50
      %s53 = sphi 0, %s52
      %s67 = sphi 0, %s53
      %s71 = sphi 0, %s71
      %s73 = sphi 0, %s71
      %s74 = sphi 0, %s73
      %s88 = sphi 0, %s74
      %s94 = sphi 0, %s96
      %s97 = sphi 0, %s94
      %s98 = sphi 0, %s97
      %s114 = sphi 0, %s98
    $region4: #{tpu_custom_call.1} parent=1 // loop_header_branch
      %19 = sbr.rel (%p17) target = $region8
    $region5: #{tpu_custom_call.1} parent=1 // loop_body
      %s21 = ssub.s32 %s16, 1
      %s22 = ssub.s32 %s16, 2
      %s23 = sadd.s32 %s16, 1
      %s24 = ssub.s32 %s16, %s23
      %p25 = scmp.eq.s32.totalorder %s24, 0
      %s27 = sadd.s32 %s26, 1
      %s28 = scalar_select %p25, %s26, %s27
      %p31 = pneg %p25
      %p32 = scmp.eq.s32.totalorder %s16, 1
      %p33 = por %p31, %p32
      %p34 = scmp.ne.s32.totalorder %s26, %s29
      %p35 = scmp.eq.s32.totalorder %s16, 0
      %p36 = por %p34, %p35
      %p37 = scmp.ne.s32.totalorder %s26, %s29
      %p38 = scmp.eq.s32.totalorder %s21, 1
      %p39 = por %p37, %p38
      %p40 = scmp.ne.s32.totalorder %s29, %s30
      %p41 = scmp.eq.s32.totalorder %s21, 0
      %p42 = por %p40, %p41
      %p43 = scmp.ne.s32.totalorder %s29, %s30
      %p44 = scmp.eq.s32.totalorder %s22, 1
      %p45 = por %p43, %p44
      %p47 = scmp.ne.s32.totalorder %s30, %s46
      %p48 = scmp.eq.s32.totalorder %s22, 0
      %p49 = por %p47, %p48
      %s51 = sadd.s32 %s50, 1
      %p54 = scmp.eq.s32.totalorder %s16, 1
      %p55 = scmp.ne.s32.totalorder %s50, %s52
      %p56 = scmp.eq.s32.totalorder %s16, 0
      %p57 = por %p55, %p56
      %p58 = scmp.ne.s32.totalorder %s50, %s52
      %p59 = scmp.eq.s32.totalorder %s21, 1
      %p60 = por %p58, %p59
      %p61 = scmp.ne.s32.totalorder %s52, %s53
      %p62 = scmp.eq.s32.totalorder %s21, 0
      %p63 = por %p61, %p62
      %p64 = scmp.ne.s32.totalorder %s52, %s53
      %p65 = scmp.eq.s32.totalorder %s22, 1
      %p66 = por %p64, %p65
      %p68 = scmp.ne.s32.totalorder %s53, %s67
      %p69 = scmp.eq.s32.totalorder %s22, 0
      %p70 = por %p68, %p69
      %s72 = sadd.s32 %s71, 1
      %p75 = scmp.eq.s32.totalorder %s16, 1
      %p76 = scmp.ne.s32.totalorder %s71, %s73
      %p77 = scmp.eq.s32.totalorder %s16, 0
      %p78 = por %p76, %p77
      %p79 = scmp.ne.s32.totalorder %s71, %s73
      %p80 = scmp.eq.s32.totalorder %s21, 1
      %p81 = por %p79, %p80
      %p82 = scmp.ne.s32.totalorder %s73, %s74
      %p83 = scmp.eq.s32.totalorder %s21, 0
      %p84 = por %p82, %p83
      %p85 = scmp.ne.s32.totalorder %s73, %s74
      %p86 = scmp.eq.s32.totalorder %s22, 1
      %p87 = por %p85, %p86
      %p89 = scmp.ne.s32.totalorder %s74, %s88
      %p90 = scmp.eq.s32.totalorder %s22, 0
      %p91 = por %p89, %p90
      %s92 = ssub.s32 %s16, %s23
      %p93 = scmp.eq.s32.totalorder %s92, 0
      %s95 = sadd.s32 %s94, 1
      %s96 = scalar_select %p93, %s94, %s95
      %p99 = pneg %p93
      %p100 = scmp.eq.s32.totalorder %s16, 1
      %p101 = por %p99, %p100
      %p102 = scmp.ne.s32.totalorder %s94, %s97
      %p103 = scmp.eq.s32.totalorder %s16, 0
      %p104 = por %p102, %p103
      %p105 = scmp.ne.s32.totalorder %s94, %s97
      %p106 = scmp.eq.s32.totalorder %s21, 1
      %p107 = por %p105, %p106
      %p108 = scmp.ne.s32.totalorder %s97, %s98
      %p109 = scmp.eq.s32.totalorder %s21, 0
      %p110 = por %p108, %p109
      %p111 = scmp.ne.s32.totalorder %s97, %s98
      %p112 = scmp.eq.s32.totalorder %s22, 1
      %p113 = por %p111, %p112
      %p115 = scmp.ne.s32.totalorder %s98, %s114
      %p116 = scmp.eq.s32.totalorder %s22, 0
      %p117 = por %p115, %p116
      %p118 = scmp.le.s32.totalorder 1, %s16
      %p119 = scmp.lt.s32.totalorder %s16, 3
      %p120 = pnand %p118, %p119
      %p121 = pneg %p120
      // Predicated region
      $region9: #{tpu_custom_call.1} parent=5 // pred_check
        _
      $region10: #{tpu_custom_call.1} parent=5 // pred_check_branch
        %123 = sbr.rel (%p120) target = $region12
      $region11: #{tpu_custom_call.1} parent=5 // pred_region
        %s124 = ssub.s32 %s16, 1
        // Predicated region
        $region13: #{tpu_custom_call.1} parent=11 // pred_check
          %p125 = pneg %p63
        $region14: #{tpu_custom_call.1} parent=11 // pred_check_branch
          %127 = sbr.rel (%p125) target = $region16
        $region15: #{tpu_custom_call.1} parent=11 // pred_region
          %s129 = ssub.s32 2048, 2048
          %130 = vsyncadd [#allocation6], %s129
          %s131 = sshll.u32 [#allocation5], 4
          %s132 = int_to_ptr.vmem [resolvable:$true] %s131
          %137 = dma.hbm_to_vmem [thread:$0]  %s1, 2048, %s132, [#allocation6], 128, 128, 8
        $region16: #{tpu_custom_call.1} parent=11 // pred_fallthru
          _
        // Predicated region
        $region17: #{tpu_custom_call.1} parent=11 // pred_check
          %p138 = pneg %p84
        $region18: #{tpu_custom_call.1} parent=11 // pred_check_branch
          %140 = sbr.rel (%p138) target = $region20
        $region19: #{tpu_custom_call.1} parent=11 // pred_region
          %s142 = ssub.s32 16, 16
          %143 = vsyncadd [#allocation6], %s142
          %s145 = sshll.u32 [#allocation7], 4
          %s146 = int_to_ptr.vmem [resolvable:$true] %s145
          %148 = dma.hbm_to_vmem [thread:$0]  %s2, 16, %s146, [#allocation6]
        $region20: #{tpu_custom_call.1} parent=11 // pred_fallthru
          _
      $region12: #{tpu_custom_call.1} parent=5 // pred_fallthru
        _
      %p149 = scmp.lt.s32.totalorder %s16, 2
      // Predicated region
      $region21: #{tpu_custom_call.1} parent=5 // pred_check
        %p150 = pneg %p149
      $region22: #{tpu_custom_call.1} parent=5 // pred_check_branch
        %152 = sbr.rel (%p150) target = $region24
      $region23: #{tpu_custom_call.1} parent=5 // pred_region
        // Predicated region
        $region25: #{tpu_custom_call.1} parent=23 // pred_check
          %p153 = pneg %p36
        $region26: #{tpu_custom_call.1} parent=23 // pred_check_branch
          %155 = sbr.rel (%p153) target = $region28
        $region27: #{tpu_custom_call.1} parent=23 // pred_region
          %s156 = sand.u32 %s26, 1
          %s157 = scalar_lea.sflag [#allocation3], %s156
          %s158 = sand.u32 %s26, 1
          %s159 = smul.addr %s158, 8
          %s160 = scalar_lea.vmem [#allocation2], %s159
          %s162 = ssub.s32 128, 128
          %163 = vsyncadd %s157, %s162
          %s164 = smul.addr %s16, 128
          %s165 = scalar_lea.hbm %s0, %s164
          %s167 = sshll.u32 %s160, 4
          %s168 = int_to_ptr.vmem [resolvable:$true] %s167
          %170 = dma.hbm_to_vmem [thread:$0]  %s165, 128, %s168, %s157
        $region28: #{tpu_custom_call.1} parent=23 // pred_fallthru
          _
      $region24: #{tpu_custom_call.1} parent=5 // pred_fallthru
        _
      %p171 = scmp.le.s32.totalorder 1, %s16
      %p172 = scmp.lt.s32.totalorder %s16, 3
      %p173 = pnand %p171, %p172
      %p174 = pneg %p173
      // Predicated region
      $region29: #{tpu_custom_call.1} parent=5 // pred_check
        _
      $region30: #{tpu_custom_call.1} parent=5 // pred_check_branch
        %176 = sbr.rel (%p173) target = $region32
      $region31: #{tpu_custom_call.1} parent=5 // pred_region
        %s177 = ssub.s32 %s16, 1
        %s178 = sand.u32 %s29, 1
        %s179 = scalar_lea.sflag [#allocation3], %s178
        %s180 = sand.u32 %s29, 1
        %s181 = smul.addr %s180, 8
        %s182 = scalar_lea.vmem [#allocation2], %s181
        // Predicated region
        $region33: #{tpu_custom_call.1} parent=31 // pred_check
          %p183 = pneg %p42
        $region34: #{tpu_custom_call.1} parent=31 // pred_check_branch
          %185 = sbr.rel (%p183) target = $region36
        $region35: #{tpu_custom_call.1} parent=31 // pred_region
          %186 = dma.done %s179, 128
        $region36: #{tpu_custom_call.1} parent=31 // pred_fallthru
          _
        // Predicated region
        $region37: #{tpu_custom_call.1} parent=31 // pred_check
          %p187 = pneg %p63
        $region38: #{tpu_custom_call.1} parent=31 // pred_check_branch
          %189 = sbr.rel (%p187) target = $region40
        $region39: #{tpu_custom_call.1} parent=31 // pred_region
          %190 = dma.done [#allocation6], 2048
        $region40: #{tpu_custom_call.1} parent=31 // pred_fallthru
          _
        // Predicated region
        $region41: #{tpu_custom_call.1} parent=31 // pred_check
          %p191 = pneg %p84
        $region42: #{tpu_custom_call.1} parent=31 // pred_check_branch
          %193 = sbr.rel (%p191) target = $region44
        $region43: #{tpu_custom_call.1} parent=31 // pred_region
          %194 = dma.done [#allocation6], 16
        $region44: #{tpu_custom_call.1} parent=31 // pred_fallthru
          _
        %s195 = sand.u32 %s29, 1
        %s196 = scalar_lea.sflag [#allocation3], %s195
        %s197 = sand.u32 %s29, 1
        %s198 = smul.addr %s197, 8
        %s199 = scalar_lea.vmem [#allocation2], %s198
        %p200 = pneg %p42
        %p201 = pneg %p39
        %p202 = pneg %p63
        %p203 = pneg %p60
        %p204 = pneg %p84
        %p205 = pneg %p81
        %p206 = pneg %p110
        %p207 = pneg %p107
        %s208 = sand.u32 %s97, 1
        %s209 = scalar_lea.sflag [#allocation4], %s208
        %s210 = sand.u32 %s97, 1
        %s211 = smul.addr %s210, 8
        %s212 = scalar_lea.vmem [#allocation8], %s211
        %v213 = vld [vmem:[%s182] sm:$0xff]
        %v214 = vld [vmem:[#allocation5] sm:$0xff]
        %v215 = vld [vmem:[#allocation5 + $0x8] sm:$0xff]
        %v216 = vld [vmem:[#allocation5 + $0x10] sm:$0xff]
        %v217 = vld [vmem:[#allocation5 + $0x18] sm:$0xff]
        %v218 = vld [vmem:[#allocation5 + $0x20] sm:$0xff]
        %v219 = vld [vmem:[#allocation5 + $0x28] sm:$0xff]
        %v220 = vld [vmem:[#allocation5 + $0x30] sm:$0xff]
        %v221 = vld [vmem:[#allocation5 + $0x38] sm:$0xff]
        %v222 = vld [vmem:[#allocation5 + $0x40] sm:$0xff]
        %v223 = vld [vmem:[#allocation5 + $0x48] sm:$0xff]
        %v224 = vld [vmem:[#allocation5 + $0x50] sm:$0xff]
        %v225 = vld [vmem:[#allocation5 + $0x58] sm:$0xff]
        %v226 = vld [vmem:[#allocation5 + $0x60] sm:$0xff]
        %v227 = vld [vmem:[#allocation5 + $0x68] sm:$0xff]
        %v228 = vld [vmem:[#allocation5 + $0x70] sm:$0xff]
        %v229 = vld [vmem:[#allocation5 + $0x78] sm:$0xff]
        %v230 = vld [vmem:[#allocation7] sm:$0x1]
        %v232 = vlaneseq
        %v233 = vshrl.u32 %v232, 7
        %v234 = vsub.s32 0, %v233
        %v235 = vrot.slane %v230, %v234
        %vm237 = vcmask 261120
        %v239 = vsel %vm237, %v213, 0
        %v242 = vsel %vm237, %v214, 0
        %v245 = vsel %vm237, %v215, 0
        %v248 = vsel %vm237, %v216, 0
        %v251 = vsel %vm237, %v217, 0
        %v254 = vsel %vm237, %v218, 0
        %v257 = vsel %vm237, %v219, 0
        %v260 = vsel %vm237, %v220, 0
        %v263 = vsel %vm237, %v221, 0
        %v266 = vsel %vm237, %v222, 0
        %v269 = vsel %vm237, %v223, 0
        %v272 = vsel %vm237, %v224, 0
        %v275 = vsel %vm237, %v225, 0
        %v278 = vsel %vm237, %v226, 0
        %v281 = vsel %vm237, %v227, 0
        %v284 = vsel %vm237, %v228, 0
        %v287 = vsel %vm237, %v229, 0
        %289 = vmatprep.subr.mxu0 0.0
        %290 = vmatpush1.xpose.msra.mxu0 %v242
        %291 = vmatprep.subr.mxu0 0.0
        %292 = vmatpush1.xpose.msra.mxu0 %v245
        %293 = vmatprep.subr.mxu0 0.0
        %294 = vmatpush1.xpose.msra.mxu0 %v248
        %295 = vmatprep.subr.mxu0 0.0
        %296 = vmatpush1.xpose.msra.mxu0 %v251
        %297 = vmatprep.subr.mxu0 0.0
        %298 = vmatpush1.xpose.msra.mxu0 %v254
        %299 = vmatprep.subr.mxu0 0.0
        %300 = vmatpush1.xpose.msra.mxu0 %v257
        %301 = vmatprep.subr.mxu0 0.0
        %302 = vmatpush1.xpose.msra.mxu0 %v260
        %303 = vmatprep.subr.mxu0 0.0
        %304 = vmatpush1.xpose.msra.mxu0 %v263
        %305 = vmatprep.subr.mxu0 0.0
        %306 = vmatpush1.xpose.msra.mxu0 %v266
        %307 = vmatprep.subr.mxu0 0.0
        %308 = vmatpush1.xpose.msra.mxu0 %v269
        %309 = vmatprep.subr.mxu0 0.0
        %310 = vmatpush1.xpose.msra.mxu0 %v272
        %311 = vmatprep.subr.mxu0 0.0
        %312 = vmatpush1.xpose.msra.mxu0 %v275
        %313 = vmatprep.subr.mxu0 0.0
        %314 = vmatpush1.xpose.msra.mxu0 %v278
        %315 = vmatprep.subr.mxu0 0.0
        %316 = vmatpush1.xpose.msra.mxu0 %v281
        %317 = vmatprep.subr.mxu0 0.0
        %318 = vmatpush1.xpose.msra.mxu0 %v284
        %319 = vmatprep.subr.mxu0 0.0
        %320 = vmatpush1.xpose.msra.mxu0 %v287
        %321 = vmatprep.subr.mxu0 0.0
        %322 = vmatpush1.xpose.msra.mxu0 0.0
        %323 = vmatprep.subr.mxu0 0.0
        %324 = vmatpush1.xpose.msra.mxu0 0.0
        %325 = vmatprep.subr.mxu0 0.0
        %326 = vmatpush1.xpose.msra.mxu0 0.0
        %327 = vmatprep.subr.mxu0 0.0
        %328 = vmatpush1.xpose.msra.mxu0 0.0
        %329 = vmatprep.subr.mxu0 0.0
        %330 = vmatpush1.xpose.msra.mxu0 0.0
        %331 = vmatprep.subr.mxu0 0.0
        %332 = vmatpush1.xpose.msra.mxu0 0.0
        %333 = vmatprep.subr.mxu0 0.0
        %334 = vmatpush1.xpose.msra.mxu0 0.0
        %335 = vmatprep.subr.mxu0 0.0
        %336 = vmatpush1.xpose.msra.mxu0 0.0
        %337 = vmatprep.subr.mxu0 0.0
        %338 = vmatpush1.xpose.msra.mxu0 0.0
        %339 = vmatprep.subr.mxu0 0.0
        %340 = vmatpush1.xpose.msra.mxu0 0.0
        %341 = vmatprep.subr.mxu0 0.0
        %342 = vmatpush1.xpose.msra.mxu0 0.0
        %343 = vmatprep.subr.mxu0 0.0
        %344 = vmatpush1.xpose.msra.mxu0 0.0
        %345 = vmatprep.subr.mxu0 0.0
        %346 = vmatpush1.xpose.msra.mxu0 0.0
        %347 = vmatprep.subr.mxu0 0.0
        %348 = vmatpush1.xpose.msra.mxu0 0.0
        %349 = vmatprep.subr.mxu0 0.0
        %350 = vmatpush1.xpose.msra.mxu0 0.0
        %351 = vmatprep.subr.mxu0 0.0
        %352 = vmatpush1.xpose.msra.mxu0 0.0
        %353 = vmatprep.mubr.f32.mxu0 0.0
        %354 = vmatmul.mubr.f32.gmra.mrb[0].mxu0 %v239
        %v355 = vpop.f32.mrb[0].mxu0
        %v356 = vadd.f32 %v235, %v355
        %v357 = vpop.f32.mrb[0].mxu0
        %358 = vdwg.mxu0
        %v359 = vtanh.pop %v356
        %360 = vst [vmem:[%s212] sm:$0xff] %v359
        %s361 = sand.u32 %s97, 1
        %s362 = scalar_lea.sflag [#allocation4], %s361
        %s363 = sand.u32 %s97, 1
        %s364 = smul.addr %s363, 8
        %s365 = scalar_lea.vmem [#allocation8], %s364
        // Predicated region
        $region45: #{tpu_custom_call.1} parent=31 // pred_check
          %p366 = pneg %p107
        $region46: #{tpu_custom_call.1} parent=31 // pred_check_branch
          %368 = sbr.rel (%p366) target = $region48
        $region47: #{tpu_custom_call.1} parent=31 // pred_region
          %s370 = ssub.s32 128, 128
          %371 = vsyncadd %s362, %s370
          %s372 = smul.addr %s21, 128
          %s373 = scalar_lea.hbm %s3, %s372
          %s375 = sshll.u32 %s365, 4
          %s376 = int_to_ptr.vmem [resolvable:$true] %s375
          %378 = dma.vmem_to_hbm [thread:$0]  %s376, 128, %s373, %s362
        $region48: #{tpu_custom_call.1} parent=31 // pred_fallthru
          _
      $region32: #{tpu_custom_call.1} parent=5 // pred_fallthru
        _
      %p379 = scmp.le.s32.totalorder 2, %s16
      // Predicated region
      $region49: #{tpu_custom_call.1} parent=5 // pred_check
        %p380 = pneg %p379
      $region50: #{tpu_custom_call.1} parent=5 // pred_check_branch
        %382 = sbr.rel (%p380) target = $region52
      $region51: #{tpu_custom_call.1} parent=5 // pred_region
        %s383 = ssub.s32 %s16, 2
        // Predicated region
        $region53: #{tpu_custom_call.1} parent=51 // pred_check
          %p384 = pneg %p113
        $region54: #{tpu_custom_call.1} parent=51 // pred_check_branch
          %386 = sbr.rel (%p384) target = $region56
        $region55: #{tpu_custom_call.1} parent=51 // pred_region
          %s387 = sand.u32 %s98, 1
          %s388 = scalar_lea.sflag [#allocation4], %s387
          %s389 = sand.u32 %s98, 1
          %s390 = smul.addr %s389, 8
          %s391 = scalar_lea.vmem [#allocation8], %s390
          %392 = dma.done %s388, 128
        $region56: #{tpu_custom_call.1} parent=51 // pred_fallthru
          _
      $region52: #{tpu_custom_call.1} parent=5 // pred_fallthru
        _
    $region6: #{tpu_custom_call.1} parent=1 // loop_footer
      %s20 = sadd.s32 1, %s16
    $region7: #{tpu_custom_call.1} parent=1 // loop_footer_branch
      %15 = sbr.rel target = $region3
    $region8: #{tpu_custom_call.1} parent=1 // loop_exit
      _
    %393 = vsyncpa [#allocation3], 1
    %s394 = scalar_lea.sflag [#allocation3], 1
    %395 = vsyncpa %s394, 1
    %396 = vsyncpa [#allocation6], 1
    %397 = vsyncpa [#allocation4], 1
    %s398 = scalar_lea.sflag [#allocation4], 1
    %399 = vsyncpa %s398, 1

</llo_original>
